<compile_context>
chip_gen: v7x
topology: tpu7x:2x2x1
jax: 0.10.0
libtpu: 0.0.40
codegen_flags: <defaults>
</compile_context>

<pallas_src>
import math

import numpy as np
import jax
import jax.numpy as jnp
from jax.experimental import pallas as pl
from jax.experimental.pallas import tpu as pltpu

# ---- model hyper-parameters (small, consistent with the module) ----
B = 2          # batch
N = 8          # sequence length
DIM = 32       # embedding dim
HEADS = 8      # attention heads
HD = DIM // HEADS
EPS = 1e-5     # nn.LayerNorm default
SCALE = DIM ** (-0.5)   # reference scales by dim**-0.5, not head_dim**-0.5

ROWS = B * N            # 16 flattened tokens
XROWS = HEADS * ROWS    # 128 expanded (head, token) rows
NEG = -1e9              # finite additive cross-batch mask (applied before row max)


def transformer1_kernel(x_ref, w_ref, b_ref, m_ref, s_ref, out_ref):
    """Single invocation, no grid.

    x_ref  : (16, 32)   flattened (B*N, DIM) input
    w_ref  : (32, 128)  [Wqkv' | Wo^T]  (LN affine + dim**-0.5 pre-folded into Wqkv')
    b_ref  : (1, 128)   [bqkv' | bo]
    m_ref  : (128, 64)  [hmask | bmask | R]  trace-constant masks / replication matrix
    s_ref  : (16, 128)  S = R^T head-fold selector
    out_ref: (16, 32)
    """
    x = x_ref[...]                                           # (16, 32)

    # ---- LayerNorm over features (affine folded into Wqkv'/bqkv') ----
    mean = jnp.mean(x, axis=-1, keepdims=True)
    cx = x - mean
    var = jnp.mean(cx * cx, axis=-1, keepdims=True)
    xn = cx * jax.lax.rsqrt(var + EPS)

    # ---- fused QKV projection for all tokens (one MXU push) ----
    qkv = jnp.dot(xn, w_ref[:, 0:3 * DIM],
                  preferred_element_type=jnp.float32) + b_ref[:, 0:3 * DIM]
    q = qkv[:, 0:DIM]
    k = qkv[:, DIM:2 * DIM]
    v = qkv[:, 2 * DIM:3 * DIM]

    hmask = m_ref[:, 0:DIM]                                  # (128, 32)
    bmask = m_ref[:, DIM:DIM + ROWS]                         # (128, 16)
    rmat = m_ref[:, DIM + ROWS:DIM + 2 * ROWS]               # (128, 16)

    # ---- expand Q to per-(head, token) rows on the MXU, zero off-head features ----
    q_exp = jnp.dot(rmat, q, preferred_element_type=jnp.float32) * hmask   # (128, 32)

    # ---- all heads & batches scores in ONE matmul; cross-batch masked additively ----
    dots = jax.lax.dot_general(q_exp, k, (((1,), (1,)), ((), ())),
                               preferred_element_type=jnp.float32)          # (128, 16)
    dots = dots + bmask                                      # before the row max (finite)

    dots = dots - jnp.max(dots, axis=-1, keepdims=True)
    e = jnp.exp(dots)
    denom = jnp.sum(e, axis=-1, keepdims=True)
    r = pl.reciprocal(denom, approx=True)                    # EUP slot
    r = r * (2.0 - denom * r)                                # one Newton step -> ~f32
    attn = e * r

    # ---- attn @ V in one matmul, fold heads back with S on the MXU ----
    out_all = jnp.dot(attn, v, preferred_element_type=jnp.float32)          # (128, 32)
    o = jnp.dot(s_ref[...], out_all * hmask,
                preferred_element_type=jnp.float32)                         # (16, 32)

    # ---- output projection + residual (x1 = attn(LN(x)) + x) ----
    proj = jnp.dot(o, w_ref[:, 3 * DIM:4 * DIM],
                   preferred_element_type=jnp.float32) + b_ref[:, 3 * DIM:4 * DIM]
    out_ref[...] = proj + x

    # TODO(synk): the MLP_Block1 + second-LayerNorm branch of Transformer1.forward is
    # dead code (the module returns x1, not x); Conv2d/BatchNorm2d members are never
    # called; Dropout is identity — intentionally not computed here.


def _make_mask_constants():
    """Host-side (numpy) constants: head mask, cross-batch mask, replication R, fold S.

    Expanded row order: r = h * (B*N) + (b*N + i).
    """
    r_head = np.arange(XROWS) // ROWS                        # head of expanded row
    r_tok = np.arange(XROWS) % ROWS                          # source token row
    d_head = np.arange(DIM) // HD
    hmask = (r_head[:, None] == d_head[None, :]).astype(np.float32)        # (128, 32)
    r_batch = r_tok // N
    c_batch = np.arange(ROWS) // N
    bmask = np.where(r_batch[:, None] == c_batch[None, :],
                     0.0, NEG).astype(np.float32)                           # (128, 16)
    rmat = (r_tok[:, None] == np.arange(ROWS)[None, :]).astype(np.float32)  # (128, 16)
    smat = np.ascontiguousarray(rmat.T)                                     # (16, 128)
    mslab = np.concatenate([hmask, bmask, rmat], axis=1)                    # (128, 64)
    return jnp.asarray(mslab), jnp.asarray(smat)


_MSLAB, _SMAT = _make_mask_constants()


def prepare_kernel_params(params):
    """One-time fold: LayerNorm affine + dim**-0.5 scale into Wqkv/bqkv; pack slabs."""
    gamma, beta, wqkv, bqkv, wo, bo = params
    wqkv_f = wqkv * gamma[0][:, None]                # gamma scales input-feature rows
    bqkv_f = bqkv + beta[0] @ wqkv                   # beta routed through the projection
    wqkv_f = wqkv_f.at[:, :DIM].multiply(SCALE)      # dim**-0.5 into the Q columns
    bqkv_f = bqkv_f.at[:, :DIM].multiply(SCALE)
    wslab = jnp.concatenate([wqkv_f, wo], axis=1)    # (32, 128) = [Wqkv' | Wo^T]
    bslab = jnp.concatenate([bqkv_f, bo], axis=1)    # (1, 128)  = [bqkv' | bo]
    return wslab, bslab


@jax.jit
def transformer1_forward(x, wslab, bslab, mslab, smat):
    xf = x.reshape(ROWS, DIM)                        # free reshape, same layout
    vmem = lambda: pl.BlockSpec(memory_space=pltpu.MemorySpace.VMEM)
    out = pl.pallas_call(
        transformer1_kernel,
        out_shape=jax.ShapeDtypeStruct((ROWS, DIM), jnp.float32),
        in_specs=[vmem(), vmem(), vmem(), vmem(), vmem()],
        out_specs=vmem(),
    )(xf, wslab, bslab, mslab, smat)
    return out.reshape(B, N, DIM)


def reference_forward(x, params):
    """Pure-JAX reference of the PyTorch Transformer1.forward output (== x1)."""
    gamma, beta, wqkv, bqkv, wo, bo = params
    mean = jnp.mean(x, axis=-1, keepdims=True)
    var = jnp.mean((x - mean) ** 2, axis=-1, keepdims=True)
    xn = (x - mean) / jnp.sqrt(var + EPS) * gamma[0] + beta[0]
    qkv = xn @ wqkv + bqkv[0]                        # (B, N, 3*DIM)
    q, k, v = jnp.split(qkv, 3, axis=-1)
    rh = lambda t: t.reshape(B, N, HEADS, HD).transpose(0, 2, 1, 3)
    q, k, v = map(rh, (q, k, v))
    dots = jnp.einsum('bhid,bhjd->bhij', q, k) * SCALE
    attn = jax.nn.softmax(dots, axis=-1)
    out = jnp.einsum('bhij,bhjd->bhid', attn, v)
    out = out.transpose(0, 2, 1, 3).reshape(B, N, DIM)
    out = out @ wo + bo[0]
    return out + x


def make_params(key):
    ks = jax.random.split(key, 4)
    gamma = jnp.ones((1, DIM), jnp.float32)          # LayerNorm defaults
    beta = jnp.zeros((1, DIM), jnp.float32)
    bq = 1.0 / math.sqrt(DIM)                        # PyTorch-style uniform init, fixed seed
    wqkv = jax.random.uniform(ks[0], (DIM, 3 * DIM), jnp.float32, -bq, bq)
    bqkv = jax.random.uniform(ks[1], (1, 3 * DIM), jnp.float32, -bq, bq)
    wo = jax.random.uniform(ks[2], (DIM, DIM), jnp.float32, -bq, bq)
    bo = jax.random.uniform(ks[3], (1, DIM), jnp.float32, -bq, bq)
    return gamma, beta, wqkv, bqkv, wo, bo


if __name__ == "__main__":
    key = jax.random.PRNGKey(0)
    kx, kp = jax.random.split(key)
    x = jax.random.normal(kx, (B, N, DIM), jnp.float32)
    params = make_params(kp)                 # "PyTorch-equivalent" raw params
    wslab, bslab = prepare_kernel_params(params)

    out = jax.block_until_ready(transformer1_forward(x, wslab, bslab, _MSLAB, _SMAT))
    ref = jax.block_until_ready(reference_forward(x, params))

    assert out.shape == (B, N, DIM)
    err = jnp.max(jnp.abs(out - ref))
    assert jnp.allclose(out, ref, atol=1e-4, rtol=1e-4), f"max abs err {err}"
    print("KERNEL_OK")
</pallas_src>

<mosaic_0001>
module attributes {stable_mosaic.version = 11 : i64} {
  func.func @transformer1_kernel(%arg0: memref<16x32xf32, #tpu.memory_space<vmem>>, %arg1: memref<32x128xf32, #tpu.memory_space<vmem>>, %arg2: memref<1x128xf32, #tpu.memory_space<vmem>>, %arg3: memref<128x64xf32, #tpu.memory_space<vmem>>, %arg4: memref<16x128xf32, #tpu.memory_space<vmem>>, %arg5: memref<16x32xf32, #tpu.memory_space<vmem>>) attributes {dimension_semantics = [], scalar_prefetch = 0 : i64, scratch_operands = 0 : i64, tpu.core_type = #tpu.core_type<tc>} {
    %c0 = arith.constant 0 : index
    %c0_0 = arith.constant 0 : index
    %0 = vector.load %arg0[%c0, %c0_0] : memref<16x32xf32, #tpu.memory_space<vmem>>, vector<16x32xf32>
    %cst = arith.constant dense<0.000000e+00> : vector<16xf32>
    %1 = vector.multi_reduction <add>, %0, %cst [1] : vector<16x32xf32> to vector<16xf32>
    %2 = vector.shape_cast %1 : vector<16xf32> to vector<16x1xf32>
    %cst_1 = arith.constant 3.200000e+01 : f32
    %3 = vector.broadcast %cst_1 : f32 to vector<16x1xf32>
    %4 = arith.divf %2, %3 : vector<16x1xf32>
    %5 = vector.broadcast %4 : vector<16x1xf32> to vector<16x32xf32>
    %6 = arith.subf %0, %5 : vector<16x32xf32>
    %7 = arith.mulf %6, %6 : vector<16x32xf32>
    %cst_2 = arith.constant dense<0.000000e+00> : vector<16xf32>
    %8 = vector.multi_reduction <add>, %7, %cst_2 [1] : vector<16x32xf32> to vector<16xf32>
    %9 = vector.shape_cast %8 : vector<16xf32> to vector<16x1xf32>
    %cst_3 = arith.constant 3.200000e+01 : f32
    %10 = vector.broadcast %cst_3 : f32 to vector<16x1xf32>
    %11 = arith.divf %9, %10 : vector<16x1xf32>
    %cst_4 = arith.constant 9.99999974E-6 : f32
    %12 = vector.broadcast %cst_4 : f32 to vector<16x1xf32>
    %13 = arith.addf %11, %12 : vector<16x1xf32>
    %14 = math.rsqrt %13 : vector<16x1xf32>
    %15 = vector.broadcast %14 : vector<16x1xf32> to vector<16x32xf32>
    %16 = arith.mulf %6, %15 : vector<16x32xf32>
    %c0_5 = arith.constant 0 : index
    %c0_6 = arith.constant 0 : index
    %17 = vector.load %arg1[%c0_5, %c0_6] : memref<32x128xf32, #tpu.memory_space<vmem>>, vector<32x96xf32>
    %cst_7 = arith.constant dense<0.000000e+00> : vector<16x96xf32>
    %18 = tpu.matmul %16, %17, %cst_7 {dimension_numbers = #tpu.dot_dimension_numbers<[1], [0], [0], [1], [0, 0, 1, 1], [], []>} : vector<16x32xf32>, vector<32x96xf32>, vector<16x96xf32> -> vector<16x96xf32>
    %c0_8 = arith.constant 0 : index
    %c0_9 = arith.constant 0 : index
    %19 = vector.load %arg2[%c0_8, %c0_9] : memref<1x128xf32, #tpu.memory_space<vmem>>, vector<1x96xf32>
    %20 = vector.broadcast %19 : vector<1x96xf32> to vector<16x96xf32>
    %21 = arith.addf %18, %20 : vector<16x96xf32>
    %22 = vector.extract_strided_slice %21 {offsets = [0, 0], sizes = [16, 32], strides = [1, 1]} : vector<16x96xf32> to vector<16x32xf32>
    %23 = vector.extract_strided_slice %21 {offsets = [0, 32], sizes = [16, 32], strides = [1, 1]} : vector<16x96xf32> to vector<16x32xf32>
    %24 = vector.extract_strided_slice %21 {offsets = [0, 64], sizes = [16, 32], strides = [1, 1]} : vector<16x96xf32> to vector<16x32xf32>
    %c0_10 = arith.constant 0 : index
    %c0_11 = arith.constant 0 : index
    %25 = vector.load %arg3[%c0_10, %c0_11] : memref<128x64xf32, #tpu.memory_space<vmem>>, vector<128x32xf32>
    %c0_12 = arith.constant 0 : index
    %c32 = arith.constant 32 : index
    %26 = vector.load %arg3[%c0_12, %c32] : memref<128x64xf32, #tpu.memory_space<vmem>>, vector<128x16xf32>
    %c0_13 = arith.constant 0 : index
    %c48 = arith.constant 48 : index
    %27 = vector.load %arg3[%c0_13, %c48] : memref<128x64xf32, #tpu.memory_space<vmem>>, vector<128x16xf32>
    %cst_14 = arith.constant dense<0.000000e+00> : vector<128x32xf32>
    %28 = tpu.matmul %27, %22, %cst_14 {dimension_numbers = #tpu.dot_dimension_numbers<[1], [0], [0], [1], [0, 0, 1, 1], [], []>} : vector<128x16xf32>, vector<16x32xf32>, vector<128x32xf32> -> vector<128x32xf32>
    %29 = arith.mulf %28, %25 : vector<128x32xf32>
    %cst_15 = arith.constant dense<0.000000e+00> : vector<128x16xf32>
    %30 = tpu.matmul %29, %23, %cst_15 {dimension_numbers = #tpu.dot_dimension_numbers<[1], [1], [0], [0], [0, 0, 1, 0], [], []>} : vector<128x32xf32>, vector<16x32xf32>, vector<128x16xf32> -> vector<128x16xf32>
    %31 = arith.addf %30, %26 : vector<128x16xf32>
    %cst_16 = arith.constant dense<0xFF800000> : vector<128xf32>
    %32 = vector.multi_reduction <maximumf>, %31, %cst_16 [1] : vector<128x16xf32> to vector<128xf32>
    %33 = vector.shape_cast %32 : vector<128xf32> to vector<128x1xf32>
    %34 = vector.broadcast %33 : vector<128x1xf32> to vector<128x16xf32>
    %35 = arith.subf %31, %34 : vector<128x16xf32>
    %36 = math.exp %35 : vector<128x16xf32>
    %cst_17 = arith.constant dense<0.000000e+00> : vector<128xf32>
    %37 = vector.multi_reduction <add>, %36, %cst_17 [1] : vector<128x16xf32> to vector<128xf32>
    %38 = vector.shape_cast %37 : vector<128xf32> to vector<128x1xf32>
    %39 = tpu.reciprocal %38 {approx = true} : vector<128x1xf32> -> vector<128x1xf32>
    %40 = arith.mulf %38, %39 : vector<128x1xf32>
    %cst_18 = arith.constant 2.000000e+00 : f32
    %41 = vector.broadcast %cst_18 : f32 to vector<128x1xf32>
    %42 = arith.subf %41, %40 : vector<128x1xf32>
    %43 = arith.mulf %39, %42 : vector<128x1xf32>
    %44 = vector.broadcast %43 : vector<128x1xf32> to vector<128x16xf32>
    %45 = arith.mulf %36, %44 : vector<128x16xf32>
    %cst_19 = arith.constant dense<0.000000e+00> : vector<128x32xf32>
    %46 = tpu.matmul %45, %24, %cst_19 {dimension_numbers = #tpu.dot_dimension_numbers<[1], [0], [0], [1], [0, 0, 1, 1], [], []>} : vector<128x16xf32>, vector<16x32xf32>, vector<128x32xf32> -> vector<128x32xf32>
    %c0_20 = arith.constant 0 : index
    %c0_21 = arith.constant 0 : index
    %47 = vector.load %arg4[%c0_20, %c0_21] : memref<16x128xf32, #tpu.memory_space<vmem>>, vector<16x128xf32>
    %48 = arith.mulf %46, %25 : vector<128x32xf32>
    %cst_22 = arith.constant dense<0.000000e+00> : vector<16x32xf32>
    %49 = tpu.matmul %47, %48, %cst_22 {dimension_numbers = #tpu.dot_dimension_numbers<[1], [0], [0], [1], [0, 0, 1, 1], [], []>} : vector<16x128xf32>, vector<128x32xf32>, vector<16x32xf32> -> vector<16x32xf32>
    %c0_23 = arith.constant 0 : index
    %c96 = arith.constant 96 : index
    %50 = vector.load %arg1[%c0_23, %c96] : memref<32x128xf32, #tpu.memory_space<vmem>>, vector<32x32xf32>
    %cst_24 = arith.constant dense<0.000000e+00> : vector<16x32xf32>
    %51 = tpu.matmul %49, %50, %cst_24 {dimension_numbers = #tpu.dot_dimension_numbers<[1], [0], [0], [1], [0, 0, 1, 1], [], []>} : vector<16x32xf32>, vector<32x32xf32>, vector<16x32xf32> -> vector<16x32xf32>
    %c0_25 = arith.constant 0 : index
    %c96_26 = arith.constant 96 : index
    %52 = vector.load %arg2[%c0_25, %c96_26] : memref<1x128xf32, #tpu.memory_space<vmem>>, vector<1x32xf32>
    %53 = vector.broadcast %52 : vector<1x32xf32> to vector<16x32xf32>
    %54 = arith.addf %51, %53 : vector<16x32xf32>
    %55 = arith.addf %54, %0 : vector<16x32xf32>
    %c0_27 = arith.constant 0 : index
    %c0_28 = arith.constant 0 : index
    %56 = vector.load %arg5[%c0_27, %c0_28] : memref<16x32xf32, #tpu.memory_space<vmem>>, vector<16x32xf32>
    tpu.vector_store %arg5[%c0_27, %c0_28], %55 {strides = array<i32>} : memref<16x32xf32, #tpu.memory_space<vmem>>, vector<16x32xf32>,
    return
  }
}

</mosaic_0001>

<llo_original>
// kernel: transformer1_forward.1
$region0: #{transformer1_forward.1}
  #allocation0 [shape = 'u32[]', space=smem, size = 0x4, offset = 0x4, fixed_abs, tag = 'smem constant byte address 0x4 - core index']
  #allocation1 [shape = 'u32[144,128]{1,0:T(1,128)}', space=vmem, size = 0x12000, scoped, tag = 'internal scratch']
  %s0 = inlined_call_operand.vmem [shape: f32[16,32], index: 0, kind: input, shape index: {}]
  %s1 = inlined_call_operand.vmem [shape: f32[32,128], index: 1, kind: input, shape index: {}]
  %s2 = inlined_call_operand.vmem [shape: f32[1,128], index: 2, kind: input, shape index: {}]
  %s3 = inlined_call_operand.vmem [shape: f32[128,64], index: 3, kind: input, shape index: {}]
  %s4 = inlined_call_operand.vmem [shape: f32[16,128], index: 4, kind: input, shape index: {}]
  %s5 = inlined_call_operand.hbm [shape: f32[16,32], index: 5, kind: output, shape index: {}]
  %s6 = sld [smem:[#allocation0]]
  $region30: #{transformer1_forward.1} parent=0
    _
  %s8 = ssub.s32 1, %s6
  %s9 = scalar_select 0, %s8, %s6
  $region1: #{transformer1_forward.1} parent=0
    #allocation2 [shape = 'u8[8192]{0}', space=vmem, size = 0x2000, scoped, tag = 'output window, operand 0, single buffered']
    #allocation3 [shape = 's32[1]{0}', space=sflag, size = 0x4, scoped, tag = 'scoped memory for transformer1_forward.1']
    %10 = vsyncpa [#allocation3], 0
    // Predicated region
    $region2: #{transformer1_forward.1} parent=1 // pred_check
      _
    $region3: #{transformer1_forward.1} parent=1 // pred_check_branch
      %12 = sbr.rel (0) target = $region5
    $region4: #{transformer1_forward.1} parent=1 // pred_region
      _
    $region5: #{transformer1_forward.1} parent=1 // pred_fallthru
      _
    // Predicated region
    $region6: #{transformer1_forward.1} parent=1 // pred_check
      _
    $region7: #{transformer1_forward.1} parent=1 // pred_check_branch
      %14 = sbr.rel (0) target = $region9
    $region8: #{transformer1_forward.1} parent=1 // pred_region
      _
    $region9: #{transformer1_forward.1} parent=1 // pred_fallthru
      _
    // Predicated region
    $region10: #{transformer1_forward.1} parent=1 // pred_check
      _
    $region11: #{transformer1_forward.1} parent=1 // pred_check_branch
      %16 = sbr.rel (0) target = $region13
    $region12: #{transformer1_forward.1} parent=1 // pred_region
      _
    $region13: #{transformer1_forward.1} parent=1 // pred_fallthru
      _
    // Predicated region
    $region14: #{transformer1_forward.1} parent=1 // pred_check
      _
    $region15: #{transformer1_forward.1} parent=1 // pred_check_branch
      %18 = sbr.rel (0) target = $region17
    $region16: #{transformer1_forward.1} parent=1 // pred_region
      _
    $region17: #{transformer1_forward.1} parent=1 // pred_fallthru
      _
    // Predicated region
    $region18: #{transformer1_forward.1} parent=1 // pred_check
      _
    $region19: #{transformer1_forward.1} parent=1 // pred_check_branch
      %20 = sbr.rel (0) target = $region21
    $region20: #{transformer1_forward.1} parent=1 // pred_region
      _
    $region21: #{transformer1_forward.1} parent=1 // pred_fallthru
      _
    %v21 = vld [vmem:[%s0] sm:$0xff]
    %v22 = vld [vmem:[%s0 + $0x8] sm:$0xff]
    %vm23 = vcmask 261120
    %v24 = vsel %vm23, %v21, 0.0
    %25 = vadd.xlane.f32.xlu0 %v24
    %v26 = vpop.xlane.xlu0 %25
    %v27 = vsel %vm23, %v22, 0.0
    %28 = vadd.xlane.f32.xlu0 %v27
    %v29 = vpop.xlane.xlu0 %28
    %v30 = vrcp.pop 32.0
    %v31 = vmul.f32 %v26, %v30
    %v32 = vmul.f32 %v29, %v30
    %v33 = vsub.f32 %v21, %v31
    %v34 = vsub.f32 %v22, %v32
    %v35 = vmul.f32 %v33, %v33
    %v36 = vmul.f32 %v34, %v34
    %v37 = vsel %vm23, %v35, 0.0
    %38 = vadd.xlane.f32.xlu0 %v37
    %v39 = vpop.xlane.xlu0 %38
    %v40 = vsel %vm23, %v36, 0.0
    %41 = vadd.xlane.f32.xlu0 %v40
    %v42 = vpop.xlane.xlu0 %41
    %v43 = vmul.f32 %v39, %v30
    %v44 = vmul.f32 %v42, %v30
    %v45 = vadd.f32 %v43, 1e-05
    %v46 = vadd.f32 %v44, 1e-05
    %v47 = vrsqrt.pop %v45
    %v48 = vrsqrt.pop %v46
    %v49 = vmul.f32 %v33, %v47
    %v50 = vmul.f32 %v34, %v48
    %v51 = vld [vmem:[%s1] sm:$0xff]
    %v52 = vld [vmem:[%s1 + $0x8] sm:$0xff]
    %v53 = vld [vmem:[%s1 + $0x10] sm:$0xff]
    %v54 = vld [vmem:[%s1 + $0x18] sm:$0xff]
    %v55 = vld [vmem:[%s2] sm:$0x1]
    %v57 = vlaneseq
    %v58 = vshrl.u32 %v57, 7
    %v59 = vsub.s32 0, %v58
    %v60 = vrot.slane %v55, %v59
    %v63 = vsel %vm23, %v49, 0
    %v66 = vsel %vm23, %v50, 0
    %68 = vmatprep.subr.mxu0 0.0
    %69 = vmatpush1.msra.mxu0 %v51
    %70 = vmatprep.subr.mxu0 0.0
    %71 = vmatpush1.msra.mxu0 %v52
    %72 = vmatprep.subr.mxu0 0.0
    %73 = vmatpush1.msra.mxu0 %v53
    %74 = vmatprep.subr.mxu0 0.0
    %75 = vmatpush1.msra.mxu0 %v54
    %76 = vmatprep.subr.mxu0 0.0
    %77 = vmatpush1.msra.mxu0 0.0
    %78 = vmatprep.subr.mxu0 0.0
    %79 = vmatpush1.msra.mxu0 0.0
    %80 = vmatprep.subr.mxu0 0.0
    %81 = vmatpush1.msra.mxu0 0.0
    %82 = vmatprep.subr.mxu0 0.0
    %83 = vmatpush1.msra.mxu0 0.0
    %84 = vmatprep.subr.mxu0 0.0
    %85 = vmatpush1.msra.mxu0 0.0
    %86 = vmatprep.subr.mxu0 0.0
    %87 = vmatpush1.msra.mxu0 0.0
    %88 = vmatprep.subr.mxu0 0.0
    %89 = vmatpush1.msra.mxu0 0.0
    %90 = vmatprep.subr.mxu0 0.0
    %91 = vmatpush1.msra.mxu0 0.0
    %92 = vmatprep.subr.mxu0 0.0
    %93 = vmatpush1.msra.mxu0 0.0
    %94 = vmatprep.subr.mxu0 0.0
    %95 = vmatpush1.msra.mxu0 0.0
    %96 = vmatprep.subr.mxu0 0.0
    %97 = vmatpush1.msra.mxu0 0.0
    %98 = vmatprep.subr.mxu0 0.0
    %99 = vmatpush1.msra.mxu0 0.0
    %100 = vmatprep.subr.mxu0 0.0
    %101 = vmatpush1.msra.mxu0 0.0
    %102 = vmatprep.subr.mxu0 0.0
    %103 = vmatpush1.msra.mxu0 0.0
    %104 = vmatprep.subr.mxu0 0.0
    %105 = vmatpush1.msra.mxu0 0.0
    %106 = vmatprep.subr.mxu0 0.0
    %107 = vmatpush1.msra.mxu0 0.0
    %108 = vmatprep.subr.mxu0 0.0
    %109 = vmatpush1.msra.mxu0 0.0
    %110 = vmatprep.subr.mxu0 0.0
    %111 = vmatpush1.msra.mxu0 0.0
    %112 = vmatprep.subr.mxu0 0.0
    %113 = vmatpush1.msra.mxu0 0.0
    %114 = vmatprep.subr.mxu0 0.0
    %115 = vmatpush1.msra.mxu0 0.0
    %116 = vmatprep.subr.mxu0 0.0
    %117 = vmatpush1.msra.mxu0 0.0
    %118 = vmatprep.subr.mxu0 0.0
    %119 = vmatpush1.msra.mxu0 0.0
    %120 = vmatprep.subr.mxu0 0.0
    %121 = vmatpush1.msra.mxu0 0.0
    %122 = vmatprep.subr.mxu0 0.0
    %123 = vmatpush1.msra.mxu0 0.0
    %124 = vmatprep.subr.mxu0 0.0
    %125 = vmatpush1.msra.mxu0 0.0
    %126 = vmatprep.subr.mxu0 0.0
    %127 = vmatpush1.msra.mxu0 0.0
    %128 = vmatprep.subr.mxu0 0.0
    %129 = vmatpush1.msra.mxu0 0.0
    %130 = vmatprep.subr.mxu0 0.0
    %131 = vmatpush1.msra.mxu0 0.0
    %132 = vmatprep.mubr.f32.mxu0 0.0
    %133 = vmatmul.mubr.f32.gmra.mrb[0].mxu0 %v63
    %v134 = vpop.f32.mrb[0].mxu0
    %v135 = vadd.f32 %v60, %v134
    %v136 = vpop.f32.mrb[0].mxu0
    %137 = vmatprep.mubr.f32.mxu0 0.0
    %138 = vmatmul.mubr.f32.gmra.mrb[0].mxu0 %v66
    %v139 = vpop.f32.mrb[0].mxu0
    %v140 = vadd.f32 %v60, %v139
    %v141 = vpop.f32.mrb[0].mxu0
    %142 = vdwg.mxu0
    %v143 = vld [vmem:[%s3] sm:$0xff]
    %v144 = vld [vmem:[%s3 + $0x8] sm:$0xff]
    %v145 = vld [vmem:[%s3 + $0x10] sm:$0xff]
    %v146 = vld [vmem:[%s3 + $0x18] sm:$0xff]
    %v147 = vld [vmem:[%s3 + $0x20] sm:$0xff]
    %v148 = vld [vmem:[%s3 + $0x28] sm:$0xff]
    %v149 = vld [vmem:[%s3 + $0x30] sm:$0xff]
    %v150 = vld [vmem:[%s3 + $0x38] sm:$0xff]
    %v151 = vld [vmem:[%s3 + $0x40] sm:$0xff]
    %v152 = vld [vmem:[%s3 + $0x48] sm:$0xff]
    %v153 = vld [vmem:[%s3 + $0x50] sm:$0xff]
    %v154 = vld [vmem:[%s3 + $0x58] sm:$0xff]
    %v155 = vld [vmem:[%s3 + $0x60] sm:$0xff]
    %v156 = vld [vmem:[%s3 + $0x68] sm:$0xff]
    %v157 = vld [vmem:[%s3 + $0x70] sm:$0xff]
    %v158 = vld [vmem:[%s3 + $0x78] sm:$0xff]
    %175 = vrot.lane.b32.xlu0 %v143, 80
    %v176 = vpop.permute.xlu0 %175
    %177 = vrot.lane.b32.xlu0 %v144, 80
    %v178 = vpop.permute.xlu0 %177
    %179 = vrot.lane.b32.xlu0 %v145, 80
    %v180 = vpop.permute.xlu0 %179
    %181 = vrot.lane.b32.xlu0 %v146, 80
    %v182 = vpop.permute.xlu0 %181
    %183 = vrot.lane.b32.xlu0 %v147, 80
    %v184 = vpop.permute.xlu0 %183
    %185 = vrot.lane.b32.xlu0 %v148, 80
    %v186 = vpop.permute.xlu0 %185
    %187 = vrot.lane.b32.xlu0 %v149, 80
    %v188 = vpop.permute.xlu0 %187
    %189 = vrot.lane.b32.xlu0 %v150, 80
    %v190 = vpop.permute.xlu0 %189
    %191 = vrot.lane.b32.xlu0 %v151, 80
    %v192 = vpop.permute.xlu0 %191
    %193 = vrot.lane.b32.xlu0 %v152, 80
    %v194 = vpop.permute.xlu0 %193
    %195 = vrot.lane.b32.xlu0 %v153, 80
    %v196 = vpop.permute.xlu0 %195
    %197 = vrot.lane.b32.xlu0 %v154, 80
    %v198 = vpop.permute.xlu0 %197
    %199 = vrot.lane.b32.xlu0 %v155, 80
    %v200 = vpop.permute.xlu0 %199
    %201 = vrot.lane.b32.xlu0 %v156, 80
    %v202 = vpop.permute.xlu0 %201
    %203 = vrot.lane.b32.xlu0 %v157, 80
    %v204 = vpop.permute.xlu0 %203
    %205 = vrot.lane.b32.xlu0 %v158, 80
    %v206 = vpop.permute.xlu0 %205
    %vm207 = vcmask 130048
    %v208 = vsel %vm207, %v176, 0
    %v210 = vsel %vm207, %v178, 0
    %v212 = vsel %vm207, %v180, 0
    %v214 = vsel %vm207, %v182, 0
    %v216 = vsel %vm207, %v184, 0
    %v218 = vsel %vm207, %v186, 0
    %v220 = vsel %vm207, %v188, 0
    %v222 = vsel %vm207, %v190, 0
    %v224 = vsel %vm207, %v192, 0
    %v226 = vsel %vm207, %v194, 0
    %v228 = vsel %vm207, %v196, 0
    %v230 = vsel %vm207, %v198, 0
    %v232 = vsel %vm207, %v200, 0
    %v234 = vsel %vm207, %v202, 0
    %v236 = vsel %vm207, %v204, 0
    %v238 = vsel %vm207, %v206, 0
    %240 = vmatprep.subr.mxu0 0.0
    %241 = vmatpush1.msra.mxu0 %v135
    %242 = vmatprep.subr.mxu0 0.0
    %243 = vmatpush1.msra.mxu0 %v140
    %244 = vmatprep.subr.mxu0 0.0
    %245 = vmatpush1.msra.mxu0 0.0
    %246 = vmatprep.subr.mxu0 0.0
    %247 = vmatpush1.msra.mxu0 0.0
    %248 = vmatprep.subr.mxu0 0.0
    %249 = vmatpush1.msra.mxu0 0.0
    %250 = vmatprep.subr.mxu0 0.0
    %251 = vmatpush1.msra.mxu0 0.0
    %252 = vmatprep.subr.mxu0 0.0
    %253 = vmatpush1.msra.mxu0 0.0
    %254 = vmatprep.subr.mxu0 0.0
    %255 = vmatpush1.msra.mxu0 0.0
    %256 = vmatprep.subr.mxu0 0.0
    %257 = vmatpush1.msra.mxu0 0.0
    %258 = vmatprep.subr.mxu0 0.0
    %259 = vmatpush1.msra.mxu0 0.0
    %260 = vmatprep.subr.mxu0 0.0
    %261 = vmatpush1.msra.mxu0 0.0
    %262 = vmatprep.subr.mxu0 0.0
    %263 = vmatpush1.msra.mxu0 0.0
    %264 = vmatprep.subr.mxu0 0.0
    %265 = vmatpush1.msra.mxu0 0.0
    %266 = vmatprep.subr.mxu0 0.0
    %267 = vmatpush1.msra.mxu0 0.0
    %268 = vmatprep.subr.mxu0 0.0
    %269 = vmatpush1.msra.mxu0 0.0
    %270 = vmatprep.subr.mxu0 0.0
    %271 = vmatpush1.msra.mxu0 0.0
    %272 = vmatprep.subr.mxu0 0.0
    %273 = vmatpush1.msra.mxu0 0.0
    %274 = vmatprep.subr.mxu0 0.0
    %275 = vmatpush1.msra.mxu0 0.0
    %276 = vmatprep.subr.mxu0 0.0
    %277 = vmatpush1.msra.mxu0 0.0
    %278 = vmatprep.subr.mxu0 0.0
    %279 = vmatpush1.msra.mxu0 0.0
    %280 = vmatprep.subr.mxu0 0.0
    %281 = vmatpush1.msra.mxu0 0.0
    %282 = vmatprep.subr.mxu0 0.0
    %283 = vmatpush1.msra.mxu0 0.0
    %284 = vmatprep.subr.mxu0 0.0
    %285 = vmatpush1.msra.mxu0 0.0
    %286 = vmatprep.subr.mxu0 0.0
    %287 = vmatpush1.msra.mxu0 0.0
    %288 = vmatprep.subr.mxu0 0.0
    %289 = vmatpush1.msra.mxu0 0.0
    %290 = vmatprep.subr.mxu0 0.0
    %291 = vmatpush1.msra.mxu0 0.0
    %292 = vmatprep.subr.mxu0 0.0
    %293 = vmatpush1.msra.mxu0 0.0
    %294 = vmatprep.subr.mxu0 0.0
    %295 = vmatpush1.msra.mxu0 0.0
    %296 = vmatprep.subr.mxu0 0.0
    %297 = vmatpush1.msra.mxu0 0.0
    %298 = vmatprep.subr.mxu0 0.0
    %299 = vmatpush1.msra.mxu0 0.0
    %300 = vmatprep.subr.mxu0 0.0
    %301 = vmatpush1.msra.mxu0 0.0
    %302 = vmatprep.subr.mxu0 0.0
    %303 = vmatpush1.msra.mxu0 0.0
    %304 = vmatprep.mubr.f32.mxu0 0.0
    %305 = vmatmul.mubr.f32.gmra.mrb[0].mxu0 %v208
    %v306 = vpop.f32.mrb[0].mxu0
    %v307 = vadd.f32 0.0, %v306
    %v308 = vpop.f32.mrb[0].mxu0
    %309 = vmatprep.mubr.f32.mxu0 0.0
    %310 = vmatmul.mubr.f32.gmra.mrb[0].mxu0 %v210
    %v311 = vpop.f32.mrb[0].mxu0
    %v312 = vadd.f32 0.0, %v311
    %v313 = vpop.f32.mrb[0].mxu0
    %314 = vmatprep.mubr.f32.mxu0 0.0
    %315 = vmatmul.mubr.f32.gmra.mrb[0].mxu0 %v212
    %v316 = vpop.f32.mrb[0].mxu0
    %v317 = vadd.f32 0.0, %v316
    %v318 = vpop.f32.mrb[0].mxu0
    %319 = vmatprep.mubr.f32.mxu0 0.0
    %320 = vmatmul.mubr.f32.gmra.mrb[0].mxu0 %v214
    %v321 = vpop.f32.mrb[0].mxu0
    %v322 = vadd.f32 0.0, %v321
    %v323 = vpop.f32.mrb[0].mxu0
    %324 = vmatprep.mubr.f32.mxu0 0.0
    %325 = vmatmul.mubr.f32.gmra.mrb[0].mxu0 %v216
    %v326 = vpop.f32.mrb[0].mxu0
    %v327 = vadd.f32 0.0, %v326
    %v328 = vpop.f32.mrb[0].mxu0
    %329 = vmatprep.mubr.f32.mxu0 0.0
    %330 = vmatmul.mubr.f32.gmra.mrb[0].mxu0 %v218
    %v331 = vpop.f32.mrb[0].mxu0
    %v332 = vadd.f32 0.0, %v331
    %v333 = vpop.f32.mrb[0].mxu0
    %334 = vmatprep.mubr.f32.mxu0 0.0
    %335 = vmatmul.mubr.f32.gmra.mrb[0].mxu0 %v220
    %v336 = vpop.f32.mrb[0].mxu0
    %v337 = vadd.f32 0.0, %v336
    %v338 = vpop.f32.mrb[0].mxu0
    %339 = vmatprep.mubr.f32.mxu0 0.0
    %340 = vmatmul.mubr.f32.gmra.mrb[0].mxu0 %v222
    %v341 = vpop.f32.mrb[0].mxu0
    %v342 = vadd.f32 0.0, %v341
    %v343 = vpop.f32.mrb[0].mxu0
    %344 = vmatprep.mubr.f32.mxu0 0.0
    %345 = vmatmul.mubr.f32.gmra.mrb[0].mxu0 %v224
    %v346 = vpop.f32.mrb[0].mxu0
    %v347 = vadd.f32 0.0, %v346
    %v348 = vpop.f32.mrb[0].mxu0
    %349 = vmatprep.mubr.f32.mxu0 0.0
    %350 = vmatmul.mubr.f32.gmra.mrb[0].mxu0 %v226
    %v351 = vpop.f32.mrb[0].mxu0
    %v352 = vadd.f32 0.0, %v351
    %v353 = vpop.f32.mrb[0].mxu0
    %354 = vmatprep.mubr.f32.mxu0 0.0
    %355 = vmatmul.mubr.f32.gmra.mrb[0].mxu0 %v228
    %v356 = vpop.f32.mrb[0].mxu0
    %v357 = vadd.f32 0.0, %v356
    %v358 = vpop.f32.mrb[0].mxu0
    %359 = vmatprep.mubr.f32.mxu0 0.0
    %360 = vmatmul.mubr.f32.gmra.mrb[0].mxu0 %v230
    %v361 = vpop.f32.mrb[0].mxu0
    %v362 = vadd.f32 0.0, %v361
    %v363 = vpop.f32.mrb[0].mxu0
    %364 = vmatprep.mubr.f32.mxu0 0.0
    %365 = vmatmul.mubr.f32.gmra.mrb[0].mxu0 %v232
    %v366 = vpop.f32.mrb[0].mxu0
    %v367 = vadd.f32 0.0, %v366
    %v368 = vpop.f32.mrb[0].mxu0
    %369 = vmatprep.mubr.f32.mxu0 0.0
    %370 = vmatmul.mubr.f32.gmra.mrb[0].mxu0 %v234
    %v371 = vpop.f32.mrb[0].mxu0
    %v372 = vadd.f32 0.0, %v371
    %v373 = vpop.f32.mrb[0].mxu0
    %374 = vmatprep.mubr.f32.mxu0 0.0
    %375 = vmatmul.mubr.f32.gmra.mrb[0].mxu0 %v236
    %v376 = vpop.f32.mrb[0].mxu0
    %v377 = vadd.f32 0.0, %v376
    %v378 = vpop.f32.mrb[0].mxu0
    %379 = vmatprep.mubr.f32.mxu0 0.0
    %380 = vmatmul.mubr.f32.gmra.mrb[0].mxu0 %v238
    %v381 = vpop.f32.mrb[0].mxu0
    %v382 = vadd.f32 0.0, %v381
    %v383 = vpop.f32.mrb[0].mxu0
    %384 = vdwg.mxu0
    %v385 = vmul.f32 %v307, %v143
    %v386 = vmul.f32 %v312, %v144
    %v387 = vmul.f32 %v317, %v145
    %v388 = vmul.f32 %v322, %v146
    %v389 = vmul.f32 %v327, %v147
    %v390 = vmul.f32 %v332, %v148
    %v391 = vmul.f32 %v337, %v149
    %v392 = vmul.f32 %v342, %v150
    %v393 = vmul.f32 %v347, %v151
    %v394 = vmul.f32 %v352, %v152
    %v395 = vmul.f32 %v357, %v153
    %v396 = vmul.f32 %v362, %v154
    %v397 = vmul.f32 %v367, %v155
    %v398 = vmul.f32 %v372, %v156
    %v399 = vmul.f32 %v377, %v157
    %v400 = vmul.f32 %v382, %v158
    %403 = vrot.lane.b32.xlu0 %v135, 96
    %v404 = vpop.permute.xlu0 %403
    %405 = vrot.lane.b32.xlu0 %v140, 96
    %v406 = vpop.permute.xlu0 %405
    %407 = vrot.lane.b32.xlu0 %v143, 96
    %v408 = vpop.permute.xlu0 %407
    %409 = vrot.lane.b32.xlu0 %v144, 96
    %v410 = vpop.permute.xlu0 %409
    %411 = vrot.lane.b32.xlu0 %v145, 96
    %v412 = vpop.permute.xlu0 %411
    %413 = vrot.lane.b32.xlu0 %v146, 96
    %v414 = vpop.permute.xlu0 %413
    %415 = vrot.lane.b32.xlu0 %v147, 96
    %v416 = vpop.permute.xlu0 %415
    %417 = vrot.lane.b32.xlu0 %v148, 96
    %v418 = vpop.permute.xlu0 %417
    %419 = vrot.lane.b32.xlu0 %v149, 96
    %v420 = vpop.permute.xlu0 %419
    %421 = vrot.lane.b32.xlu0 %v150, 96
    %v422 = vpop.permute.xlu0 %421
    %423 = vrot.lane.b32.xlu0 %v151, 96
    %v424 = vpop.permute.xlu0 %423
    %425 = vrot.lane.b32.xlu0 %v152, 96
    %v426 = vpop.permute.xlu0 %425
    %427 = vrot.lane.b32.xlu0 %v153, 96
    %v428 = vpop.permute.xlu0 %427
    %429 = vrot.lane.b32.xlu0 %v154, 96
    %v430 = vpop.permute.xlu0 %429
    %431 = vrot.lane.b32.xlu0 %v155, 96
    %v432 = vpop.permute.xlu0 %431
    %433 = vrot.lane.b32.xlu0 %v156, 96
    %v434 = vpop.permute.xlu0 %433
    %435 = vrot.lane.b32.xlu0 %v157, 96
    %v436 = vpop.permute.xlu0 %435
    %437 = vrot.lane.b32.xlu0 %v158, 96
    %v438 = vpop.permute.xlu0 %437
    %v456 = vsel %vm23, %v385, 0
    %v459 = vsel %vm23, %v386, 0
    %v462 = vsel %vm23, %v387, 0
    %v465 = vsel %vm23, %v388, 0
    %v468 = vsel %vm23, %v389, 0
    %v471 = vsel %vm23, %v390, 0
    %v474 = vsel %vm23, %v391, 0
    %v477 = vsel %vm23, %v392, 0
    %v480 = vsel %vm23, %v393, 0
    %v483 = vsel %vm23, %v394, 0
    %v486 = vsel %vm23, %v395, 0
    %v489 = vsel %vm23, %v396, 0
    %v492 = vsel %vm23, %v397, 0
    %v495 = vsel %vm23, %v398, 0
    %v498 = vsel %vm23, %v399, 0
    %v501 = vsel %vm23, %v400, 0
    %v503 = vsel %vm23, %v404, 0
    %v505 = vsel %vm23, %v406, 0
    %507 = vmatprep.subr.mxu0 0.0
    %508 = vmatpush1.xpose.msra.mxu0 %v503
    %509 = vmatprep.subr.mxu0 0.0
    %510 = vmatpush1.xpose.msra.mxu0 %v505
    %511 = vmatprep.subr.mxu0 0.0
    %512 = vmatpush1.xpose.msra.mxu0 0.0
    %513 = vmatprep.subr.mxu0 0.0
    %514 = vmatpush1.xpose.msra.mxu0 0.0
    %515 = vmatprep.subr.mxu0 0.0
    %516 = vmatpush1.xpose.msra.mxu0 0.0
    %517 = vmatprep.subr.mxu0 0.0
    %518 = vmatpush1.xpose.msra.mxu0 0.0
    %519 = vmatprep.subr.mxu0 0.0
    %520 = vmatpush1.xpose.msra.mxu0 0.0
    %521 = vmatprep.subr.mxu0 0.0
    %522 = vmatpush1.xpose.msra.mxu0 0.0
    %523 = vmatprep.subr.mxu0 0.0
    %524 = vmatpush1.xpose.msra.mxu0 0.0
    %525 = vmatprep.subr.mxu0 0.0
    %526 = vmatpush1.xpose.msra.mxu0 0.0
    %527 = vmatprep.subr.mxu0 0.0
    %528 = vmatpush1.xpose.msra.mxu0 0.0
    %529 = vmatprep.subr.mxu0 0.0
    %530 = vmatpush1.xpose.msra.mxu0 0.0
    %531 = vmatprep.subr.mxu0 0.0
    %532 = vmatpush1.xpose.msra.mxu0 0.0
    %533 = vmatprep.subr.mxu0 0.0
    %534 = vmatpush1.xpose.msra.mxu0 0.0
    %535 = vmatprep.subr.mxu0 0.0
    %536 = vmatpush1.xpose.msra.mxu0 0.0
    %537 = vmatprep.subr.mxu0 0.0
    %538 = vmatpush1.xpose.msra.mxu0 0.0
    %539 = vmatprep.subr.mxu0 0.0
    %540 = vmatpush1.xpose.msra.mxu0 0.0
    %541 = vmatprep.subr.mxu0 0.0
    %542 = vmatpush1.xpose.msra.mxu0 0.0
    %543 = vmatprep.subr.mxu0 0.0
    %544 = vmatpush1.xpose.msra.mxu0 0.0
    %545 = vmatprep.subr.mxu0 0.0
    %546 = vmatpush1.xpose.msra.mxu0 0.0
    %547 = vmatprep.subr.mxu0 0.0
    %548 = vmatpush1.xpose.msra.mxu0 0.0
    %549 = vmatprep.subr.mxu0 0.0
    %550 = vmatpush1.xpose.msra.mxu0 0.0
    %551 = vmatprep.subr.mxu0 0.0
    %552 = vmatpush1.xpose.msra.mxu0 0.0
    %553 = vmatprep.subr.mxu0 0.0
    %554 = vmatpush1.xpose.msra.mxu0 0.0
    %555 = vmatprep.subr.mxu0 0.0
    %556 = vmatpush1.xpose.msra.mxu0 0.0
    %557 = vmatprep.subr.mxu0 0.0
    %558 = vmatpush1.xpose.msra.mxu0 0.0
    %559 = vmatprep.subr.mxu0 0.0
    %560 = vmatpush1.xpose.msra.mxu0 0.0
    %561 = vmatprep.subr.mxu0 0.0
    %562 = vmatpush1.xpose.msra.mxu0 0.0
    %563 = vmatprep.subr.mxu0 0.0
    %564 = vmatpush1.xpose.msra.mxu0 0.0
    %565 = vmatprep.subr.mxu0 0.0
    %566 = vmatpush1.xpose.msra.mxu0 0.0
    %567 = vmatprep.subr.mxu0 0.0
    %568 = vmatpush1.xpose.msra.mxu0 0.0
    %569 = vmatprep.subr.mxu0 0.0
    %570 = vmatpush1.xpose.msra.mxu0 0.0
    %571 = vmatprep.mubr.f32.mxu0 0.0
    %572 = vmatmul.mubr.f32.gmra.mrb[0].mxu0 %v456
    %v573 = vpop.f32.mrb[0].mxu0
    %v574 = vadd.f32 %v408, %v573
    %v575 = vpop.f32.mrb[0].mxu0
    %576 = vmatprep.mubr.f32.mxu0 0.0
    %577 = vmatmul.mubr.f32.gmra.mrb[0].mxu0 %v459
    %v578 = vpop.f32.mrb[0].mxu0
    %v579 = vadd.f32 %v410, %v578
    %v580 = vpop.f32.mrb[0].mxu0
    %581 = vmatprep.mubr.f32.mxu0 0.0
    %582 = vmatmul.mubr.f32.gmra.mrb[0].mxu0 %v462
    %v583 = vpop.f32.mrb[0].mxu0
    %v584 = vadd.f32 %v412, %v583
    %v585 = vpop.f32.mrb[0].mxu0
    %586 = vmatprep.mubr.f32.mxu0 0.0
    %587 = vmatmul.mubr.f32.gmra.mrb[0].mxu0 %v465
    %v588 = vpop.f32.mrb[0].mxu0
    %v589 = vadd.f32 %v414, %v588
    %v590 = vpop.f32.mrb[0].mxu0
    %591 = vmatprep.mubr.f32.mxu0 0.0
    %592 = vmatmul.mubr.f32.gmra.mrb[0].mxu0 %v468
    %v593 = vpop.f32.mrb[0].mxu0
    %v594 = vadd.f32 %v416, %v593
    %v595 = vpop.f32.mrb[0].mxu0
    %596 = vmatprep.mubr.f32.mxu0 0.0
    %597 = vmatmul.mubr.f32.gmra.mrb[0].mxu0 %v471
    %v598 = vpop.f32.mrb[0].mxu0
    %v599 = vadd.f32 %v418, %v598
    %v600 = vpop.f32.mrb[0].mxu0
    %601 = vmatprep.mubr.f32.mxu0 0.0
    %602 = vmatmul.mubr.f32.gmra.mrb[0].mxu0 %v474
    %v603 = vpop.f32.mrb[0].mxu0
    %v604 = vadd.f32 %v420, %v603
    %v605 = vpop.f32.mrb[0].mxu0
    %606 = vmatprep.mubr.f32.mxu0 0.0
    %607 = vmatmul.mubr.f32.gmra.mrb[0].mxu0 %v477
    %v608 = vpop.f32.mrb[0].mxu0
    %v609 = vadd.f32 %v422, %v608
    %v610 = vpop.f32.mrb[0].mxu0
    %611 = vmatprep.mubr.f32.mxu0 0.0
    %612 = vmatmul.mubr.f32.gmra.mrb[0].mxu0 %v480
    %v613 = vpop.f32.mrb[0].mxu0
    %v614 = vadd.f32 %v424, %v613
    %v615 = vpop.f32.mrb[0].mxu0
    %616 = vmatprep.mubr.f32.mxu0 0.0
    %617 = vmatmul.mubr.f32.gmra.mrb[0].mxu0 %v483
    %v618 = vpop.f32.mrb[0].mxu0
    %v619 = vadd.f32 %v426, %v618
    %v620 = vpop.f32.mrb[0].mxu0
    %621 = vmatprep.mubr.f32.mxu0 0.0
    %622 = vmatmul.mubr.f32.gmra.mrb[0].mxu0 %v486
    %v623 = vpop.f32.mrb[0].mxu0
    %v624 = vadd.f32 %v428, %v623
    %v625 = vpop.f32.mrb[0].mxu0
    %626 = vmatprep.mubr.f32.mxu0 0.0
    %627 = vmatmul.mubr.f32.gmra.mrb[0].mxu0 %v489
    %v628 = vpop.f32.mrb[0].mxu0
    %v629 = vadd.f32 %v430, %v628
    %v630 = vpop.f32.mrb[0].mxu0
    %631 = vmatprep.mubr.f32.mxu0 0.0
    %632 = vmatmul.mubr.f32.gmra.mrb[0].mxu0 %v492
    %v633 = vpop.f32.mrb[0].mxu0
    %v634 = vadd.f32 %v432, %v633
    %v635 = vpop.f32.mrb[0].mxu0
    %636 = vmatprep.mubr.f32.mxu0 0.0
    %637 = vmatmul.mubr.f32.gmra.mrb[0].mxu0 %v495
    %v638 = vpop.f32.mrb[0].mxu0
    %v639 = vadd.f32 %v434, %v638
    %v640 = vpop.f32.mrb[0].mxu0
    %641 = vmatprep.mubr.f32.mxu0 0.0
    %642 = vmatmul.mubr.f32.gmra.mrb[0].mxu0 %v498
    %v643 = vpop.f32.mrb[0].mxu0
    %v644 = vadd.f32 %v436, %v643
    %v645 = vpop.f32.mrb[0].mxu0
    %646 = vmatprep.mubr.f32.mxu0 0.0
    %647 = vmatmul.mubr.f32.gmra.mrb[0].mxu0 %v501
    %v648 = vpop.f32.mrb[0].mxu0
    %v649 = vadd.f32 %v438, %v648
    %v650 = vpop.f32.mrb[0].mxu0
    %651 = vdwg.mxu0
    %v652 = vsel %vm207, %v574, -inf
    %653 = vmax.xlane.f32.xlu0 %v652
    %v654 = vpop.xlane.xlu0 %653
    %v655 = vsel %vm207, %v579, -inf
    %656 = vmax.xlane.f32.xlu0 %v655
    %v657 = vpop.xlane.xlu0 %656
    %v658 = vsel %vm207, %v584, -inf
    %659 = vmax.xlane.f32.xlu0 %v658
    %v660 = vpop.xlane.xlu0 %659
    %v661 = vsel %vm207, %v589, -inf
    %662 = vmax.xlane.f32.xlu0 %v661
    %v663 = vpop.xlane.xlu0 %662
    %v664 = vsel %vm207, %v594, -inf
    %665 = vmax.xlane.f32.xlu0 %v664
    %v666 = vpop.xlane.xlu0 %665
    %v667 = vsel %vm207, %v599, -inf
    %668 = vmax.xlane.f32.xlu0 %v667
    %v669 = vpop.xlane.xlu0 %668
    %v670 = vsel %vm207, %v604, -inf
    %671 = vmax.xlane.f32.xlu0 %v670
    %v672 = vpop.xlane.xlu0 %671
    %v673 = vsel %vm207, %v609, -inf
    %674 = vmax.xlane.f32.xlu0 %v673
    %v675 = vpop.xlane.xlu0 %674
    %v676 = vsel %vm207, %v614, -inf
    %677 = vmax.xlane.f32.xlu0 %v676
    %v678 = vpop.xlane.xlu0 %677
    %v679 = vsel %vm207, %v619, -inf
    %680 = vmax.xlane.f32.xlu0 %v679
    %v681 = vpop.xlane.xlu0 %680
    %v682 = vsel %vm207, %v624, -inf
    %683 = vmax.xlane.f32.xlu0 %v682
    %v684 = vpop.xlane.xlu0 %683
    %v685 = vsel %vm207, %v629, -inf
    %686 = vmax.xlane.f32.xlu0 %v685
    %v687 = vpop.xlane.xlu0 %686
    %v688 = vsel %vm207, %v634, -inf
    %689 = vmax.xlane.f32.xlu0 %v688
    %v690 = vpop.xlane.xlu0 %689
    %v691 = vsel %vm207, %v639, -inf
    %692 = vmax.xlane.f32.xlu0 %v691
    %v693 = vpop.xlane.xlu0 %692
    %v694 = vsel %vm207, %v644, -inf
    %695 = vmax.xlane.f32.xlu0 %v694
    %v696 = vpop.xlane.xlu0 %695
    %v697 = vsel %vm207, %v649, -inf
    %698 = vmax.xlane.f32.xlu0 %v697
    %v699 = vpop.xlane.xlu0 %698
    %v700 = vsub.f32 %v574, %v654
    %v701 = vsub.f32 %v579, %v657
    %v702 = vsub.f32 %v584, %v660
    %v703 = vsub.f32 %v589, %v663
    %v704 = vsub.f32 %v594, %v666
    %v705 = vsub.f32 %v599, %v669
    %v706 = vsub.f32 %v604, %v672
    %v707 = vsub.f32 %v609, %v675
    %v708 = vsub.f32 %v614, %v678
    %v709 = vsub.f32 %v619, %v681
    %v710 = vsub.f32 %v624, %v684
    %v711 = vsub.f32 %v629, %v687
    %v712 = vsub.f32 %v634, %v690
    %v713 = vsub.f32 %v639, %v693
    %v714 = vsub.f32 %v644, %v696
    %v715 = vsub.f32 %v649, %v699
    %v716 = vmul.f32 %v700, 1.442695
    %v717 = vpow.pop %v716
    %v718 = vmul.f32 %v701, 1.442695
    %v719 = vpow.pop %v718
    %v720 = vmul.f32 %v702, 1.442695
    %v721 = vpow.pop %v720
    %v722 = vmul.f32 %v703, 1.442695
    %v723 = vpow.pop %v722
    %v724 = vmul.f32 %v704, 1.442695
    %v725 = vpow.pop %v724
    %v726 = vmul.f32 %v705, 1.442695
    %v727 = vpow.pop %v726
    %v728 = vmul.f32 %v706, 1.442695
    %v729 = vpow.pop %v728
    %v730 = vmul.f32 %v707, 1.442695
    %v731 = vpow.pop %v730
    %v732 = vmul.f32 %v708, 1.442695
    %v733 = vpow.pop %v732
    %v734 = vmul.f32 %v709, 1.442695
    %v735 = vpow.pop %v734
    %v736 = vmul.f32 %v710, 1.442695
    %v737 = vpow.pop %v736
    %v738 = vmul.f32 %v711, 1.442695
    %v739 = vpow.pop %v738
    %v740 = vmul.f32 %v712, 1.442695
    %v741 = vpow.pop %v740
    %v742 = vmul.f32 %v713, 1.442695
    %v743 = vpow.pop %v742
    %v744 = vmul.f32 %v714, 1.442695
    %v745 = vpow.pop %v744
    %v746 = vmul.f32 %v715, 1.442695
    %v747 = vpow.pop %v746
    %v748 = vsel %vm207, %v717, 0.0
    %749 = vadd.xlane.f32.xlu0 %v748
    %v750 = vpop.xlane.xlu0 %749
    %v751 = vsel %vm207, %v719, 0.0
    %752 = vadd.xlane.f32.xlu0 %v751
    %v753 = vpop.xlane.xlu0 %752
    %v754 = vsel %vm207, %v721, 0.0
    %755 = vadd.xlane.f32.xlu0 %v754
    %v756 = vpop.xlane.xlu0 %755
    %v757 = vsel %vm207, %v723, 0.0
    %758 = vadd.xlane.f32.xlu0 %v757
    %v759 = vpop.xlane.xlu0 %758
    %v760 = vsel %vm207, %v725, 0.0
    %761 = vadd.xlane.f32.xlu0 %v760
    %v762 = vpop.xlane.xlu0 %761
    %v763 = vsel %vm207, %v727, 0.0
    %764 = vadd.xlane.f32.xlu0 %v763
    %v765 = vpop.xlane.xlu0 %764
    %v766 = vsel %vm207, %v729, 0.0
    %767 = vadd.xlane.f32.xlu0 %v766
    %v768 = vpop.xlane.xlu0 %767
    %v769 = vsel %vm207, %v731, 0.0
    %770 = vadd.xlane.f32.xlu0 %v769
    %v771 = vpop.xlane.xlu0 %770
    %v772 = vsel %vm207, %v733, 0.0
    %773 = vadd.xlane.f32.xlu0 %v772
    %v774 = vpop.xlane.xlu0 %773
    %v775 = vsel %vm207, %v735, 0.0
    %776 = vadd.xlane.f32.xlu0 %v775
    %v777 = vpop.xlane.xlu0 %776
    %v778 = vsel %vm207, %v737, 0.0
    %779 = vadd.xlane.f32.xlu0 %v778
    %v780 = vpop.xlane.xlu0 %779
    %v781 = vsel %vm207, %v739, 0.0
    %782 = vadd.xlane.f32.xlu0 %v781
    %v783 = vpop.xlane.xlu0 %782
    %v784 = vsel %vm207, %v741, 0.0
    %785 = vadd.xlane.f32.xlu0 %v784
    %v786 = vpop.xlane.xlu0 %785
    %v787 = vsel %vm207, %v743, 0.0
    %788 = vadd.xlane.f32.xlu0 %v787
    %v789 = vpop.xlane.xlu0 %788
    %v790 = vsel %vm207, %v745, 0.0
    %791 = vadd.xlane.f32.xlu0 %v790
    %v792 = vpop.xlane.xlu0 %791
    %v793 = vsel %vm207, %v747, 0.0
    %794 = vadd.xlane.f32.xlu0 %v793
    %v795 = vpop.xlane.xlu0 %794
    %v796 = vrcp.pop %v750
    %v797 = vrcp.pop %v753
    %v798 = vrcp.pop %v756
    %v799 = vrcp.pop %v759
    %v800 = vrcp.pop %v762
    %v801 = vrcp.pop %v765
    %v802 = vrcp.pop %v768
    %v803 = vrcp.pop %v771
    %v804 = vrcp.pop %v774
    %v805 = vrcp.pop %v777
    %v806 = vrcp.pop %v780
    %v807 = vrcp.pop %v783
    %v808 = vrcp.pop %v786
    %v809 = vrcp.pop %v789
    %v810 = vrcp.pop %v792
    %v811 = vrcp.pop %v795
    %v812 = vmul.f32 %v750, %v796
    %v813 = vmul.f32 %v753, %v797
    %v814 = vmul.f32 %v756, %v798
    %v815 = vmul.f32 %v759, %v799
    %v816 = vmul.f32 %v762, %v800
    %v817 = vmul.f32 %v765, %v801
    %v818 = vmul.f32 %v768, %v802
    %v819 = vmul.f32 %v771, %v803
    %v820 = vmul.f32 %v774, %v804
    %v821 = vmul.f32 %v777, %v805
    %v822 = vmul.f32 %v780, %v806
    %v823 = vmul.f32 %v783, %v807
    %v824 = vmul.f32 %v786, %v808
    %v825 = vmul.f32 %v789, %v809
    %v826 = vmul.f32 %v792, %v810
    %v827 = vmul.f32 %v795, %v811
    %v828 = vsub.f32 2.0, %v812
    %v829 = vsub.f32 2.0, %v813
    %v830 = vsub.f32 2.0, %v814
    %v831 = vsub.f32 2.0, %v815
    %v832 = vsub.f32 2.0, %v816
    %v833 = vsub.f32 2.0, %v817
    %v834 = vsub.f32 2.0, %v818
    %v835 = vsub.f32 2.0, %v819
    %v836 = vsub.f32 2.0, %v820
    %v837 = vsub.f32 2.0, %v821
    %v838 = vsub.f32 2.0, %v822
    %v839 = vsub.f32 2.0, %v823
    %v840 = vsub.f32 2.0, %v824
    %v841 = vsub.f32 2.0, %v825
    %v842 = vsub.f32 2.0, %v826
    %v843 = vsub.f32 2.0, %v827
    %v844 = vmul.f32 %v796, %v828
    %v845 = vmul.f32 %v797, %v829
    %v846 = vmul.f32 %v798, %v830
    %v847 = vmul.f32 %v799, %v831
    %v848 = vmul.f32 %v800, %v832
    %v849 = vmul.f32 %v801, %v833
    %v850 = vmul.f32 %v802, %v834
    %v851 = vmul.f32 %v803, %v835
    %v852 = vmul.f32 %v804, %v836
    %v853 = vmul.f32 %v805, %v837
    %v854 = vmul.f32 %v806, %v838
    %v855 = vmul.f32 %v807, %v839
    %v856 = vmul.f32 %v808, %v840
    %v857 = vmul.f32 %v809, %v841
    %v858 = vmul.f32 %v810, %v842
    %v859 = vmul.f32 %v811, %v843
    %v860 = vmul.f32 %v717, %v844
    %v861 = vmul.f32 %v719, %v845
    %v862 = vmul.f32 %v721, %v846
    %v863 = vmul.f32 %v723, %v847
    %v864 = vmul.f32 %v725, %v848
    %v865 = vmul.f32 %v727, %v849
    %v866 = vmul.f32 %v729, %v850
    %v867 = vmul.f32 %v731, %v851
    %v868 = vmul.f32 %v733, %v852
    %v869 = vmul.f32 %v735, %v853
    %v870 = vmul.f32 %v737, %v854
    %v871 = vmul.f32 %v739, %v855
    %v872 = vmul.f32 %v741, %v856
    %v873 = vmul.f32 %v743, %v857
    %v874 = vmul.f32 %v745, %v858
    %v875 = vmul.f32 %v747, %v859
    %876 = vrot.lane.b32.xlu0 %v135, 64
    %v877 = vpop.permute.xlu0 %876
    %878 = vrot.lane.b32.xlu0 %v140, 64
    %v879 = vpop.permute.xlu0 %878
    %v883 = vsel %vm207, %v860, 0
    %v886 = vsel %vm207, %v861, 0
    %v889 = vsel %vm207, %v862, 0
    %v892 = vsel %vm207, %v863, 0
    %v895 = vsel %vm207, %v864, 0
    %v898 = vsel %vm207, %v865, 0
    %v901 = vsel %vm207, %v866, 0
    %v904 = vsel %vm207, %v867, 0
    %v907 = vsel %vm207, %v868, 0
    %v910 = vsel %vm207, %v869, 0
    %v913 = vsel %vm207, %v870, 0
    %v916 = vsel %vm207, %v871, 0
    %v919 = vsel %vm207, %v872, 0
    %v922 = vsel %vm207, %v873, 0
    %v925 = vsel %vm207, %v874, 0
    %v928 = vsel %vm207, %v875, 0
    %930 = vmatprep.subr.mxu0 0.0
    %931 = vmatpush1.msra.mxu0 %v877
    %932 = vmatprep.subr.mxu0 0.0
    %933 = vmatpush1.msra.mxu0 %v879
    %934 = vmatprep.subr.mxu0 0.0
    %935 = vmatpush1.msra.mxu0 0.0
    %936 = vmatprep.subr.mxu0 0.0
    %937 = vmatpush1.msra.mxu0 0.0
    %938 = vmatprep.subr.mxu0 0.0
    %939 = vmatpush1.msra.mxu0 0.0
    %940 = vmatprep.subr.mxu0 0.0
    %941 = vmatpush1.msra.mxu0 0.0
    %942 = vmatprep.subr.mxu0 0.0
    %943 = vmatpush1.msra.mxu0 0.0
    %944 = vmatprep.subr.mxu0 0.0
    %945 = vmatpush1.msra.mxu0 0.0
    %946 = vmatprep.subr.mxu0 0.0
    %947 = vmatpush1.msra.mxu0 0.0
    %948 = vmatprep.subr.mxu0 0.0
    %949 = vmatpush1.msra.mxu0 0.0
    %950 = vmatprep.subr.mxu0 0.0
    %951 = vmatpush1.msra.mxu0 0.0
    %952 = vmatprep.subr.mxu0 0.0
    %953 = vmatpush1.msra.mxu0 0.0
    %954 = vmatprep.subr.mxu0 0.0
    %955 = vmatpush1.msra.mxu0 0.0
    %956 = vmatprep.subr.mxu0 0.0
    %957 = vmatpush1.msra.mxu0 0.0
    %958 = vmatprep.subr.mxu0 0.0
    %959 = vmatpush1.msra.mxu0 0.0
    %960 = vmatprep.subr.mxu0 0.0
    %961 = vmatpush1.msra.mxu0 0.0
    %962 = vmatprep.subr.mxu0 0.0
    %963 = vmatpush1.msra.mxu0 0.0
    %964 = vmatprep.subr.mxu0 0.0
    %965 = vmatpush1.msra.mxu0 0.0
    %966 = vmatprep.subr.mxu0 0.0
    %967 = vmatpush1.msra.mxu0 0.0
    %968 = vmatprep.subr.mxu0 0.0
    %969 = vmatpush1.msra.mxu0 0.0
    %970 = vmatprep.subr.mxu0 0.0
    %971 = vmatpush1.msra.mxu0 0.0
    %972 = vmatprep.subr.mxu0 0.0
    %973 = vmatpush1.msra.mxu0 0.0
    %974 = vmatprep.subr.mxu0 0.0
    %975 = vmatpush1.msra.mxu0 0.0
    %976 = vmatprep.subr.mxu0 0.0
    %977 = vmatpush1.msra.mxu0 0.0
    %978 = vmatprep.subr.mxu0 0.0
    %979 = vmatpush1.msra.mxu0 0.0
    %980 = vmatprep.subr.mxu0 0.0
    %981 = vmatpush1.msra.mxu0 0.0
    %982 = vmatprep.subr.mxu0 0.0
    %983 = vmatpush1.msra.mxu0 0.0
    %984 = vmatprep.subr.mxu0 0.0
    %985 = vmatpush1.msra.mxu0 0.0
    %986 = vmatprep.subr.mxu0 0.0
    %987 = vmatpush1.msra.mxu0 0.0
    %988 = vmatprep.subr.mxu0 0.0
    %989 = vmatpush1.msra.mxu0 0.0
    %990 = vmatprep.subr.mxu0 0.0
    %991 = vmatpush1.msra.mxu0 0.0
    %992 = vmatprep.subr.mxu0 0.0
    %993 = vmatpush1.msra.mxu0 0.0
    %994 = vmatprep.mubr.f32.mxu0 0.0
    %995 = vmatmul.mubr.f32.gmra.mrb[0].mxu0 %v883
    %v996 = vpop.f32.mrb[0].mxu0
    %v997 = vadd.f32 0.0, %v996
    %v998 = vpop.f32.mrb[0].mxu0
    %999 = vmatprep.mubr.f32.mxu0 0.0
    %1000 = vmatmul.mubr.f32.gmra.mrb[0].mxu0 %v886
    %v1001 = vpop.f32.mrb[0].mxu0
    %v1002 = vadd.f32 0.0, %v1001
    %v1003 = vpop.f32.mrb[0].mxu0
    %1004 = vmatprep.mubr.f32.mxu0 0.0
    %1005 = vmatmul.mubr.f32.gmra.mrb[0].mxu0 %v889
    %v1006 = vpop.f32.mrb[0].mxu0
    %v1007 = vadd.f32 0.0, %v1006
    %v1008 = vpop.f32.mrb[0].mxu0
    %1009 = vmatprep.mubr.f32.mxu0 0.0
    %1010 = vmatmul.mubr.f32.gmra.mrb[0].mxu0 %v892
    %v1011 = vpop.f32.mrb[0].mxu0
    %v1012 = vadd.f32 0.0, %v1011
    %v1013 = vpop.f32.mrb[0].mxu0
    %1014 = vmatprep.mubr.f32.mxu0 0.0
    %1015 = vmatmul.mubr.f32.gmra.mrb[0].mxu0 %v895
    %v1016 = vpop.f32.mrb[0].mxu0
    %v1017 = vadd.f32 0.0, %v1016
    %v1018 = vpop.f32.mrb[0].mxu0
    %1019 = vmatprep.mubr.f32.mxu0 0.0
    %1020 = vmatmul.mubr.f32.gmra.mrb[0].mxu0 %v898
    %v1021 = vpop.f32.mrb[0].mxu0
    %v1022 = vadd.f32 0.0, %v1021
    %v1023 = vpop.f32.mrb[0].mxu0
    %1024 = vmatprep.mubr.f32.mxu0 0.0
    %1025 = vmatmul.mubr.f32.gmra.mrb[0].mxu0 %v901
    %v1026 = vpop.f32.mrb[0].mxu0
    %v1027 = vadd.f32 0.0, %v1026
    %v1028 = vpop.f32.mrb[0].mxu0
    %1029 = vmatprep.mubr.f32.mxu0 0.0
    %1030 = vmatmul.mubr.f32.gmra.mrb[0].mxu0 %v904
    %v1031 = vpop.f32.mrb[0].mxu0
    %v1032 = vadd.f32 0.0, %v1031
    %v1033 = vpop.f32.mrb[0].mxu0
    %1034 = vmatprep.mubr.f32.mxu0 0.0
    %1035 = vmatmul.mubr.f32.gmra.mrb[0].mxu0 %v907
    %v1036 = vpop.f32.mrb[0].mxu0
    %v1037 = vadd.f32 0.0, %v1036
    %v1038 = vpop.f32.mrb[0].mxu0
    %1039 = vmatprep.mubr.f32.mxu0 0.0
    %1040 = vmatmul.mubr.f32.gmra.mrb[0].mxu0 %v910
    %v1041 = vpop.f32.mrb[0].mxu0
    %v1042 = vadd.f32 0.0, %v1041
    %v1043 = vpop.f32.mrb[0].mxu0
    %1044 = vmatprep.mubr.f32.mxu0 0.0
    %1045 = vmatmul.mubr.f32.gmra.mrb[0].mxu0 %v913
    %v1046 = vpop.f32.mrb[0].mxu0
    %v1047 = vadd.f32 0.0, %v1046
    %v1048 = vpop.f32.mrb[0].mxu0
    %1049 = vmatprep.mubr.f32.mxu0 0.0
    %1050 = vmatmul.mubr.f32.gmra.mrb[0].mxu0 %v916
    %v1051 = vpop.f32.mrb[0].mxu0
    %v1052 = vadd.f32 0.0, %v1051
    %v1053 = vpop.f32.mrb[0].mxu0
    %1054 = vmatprep.mubr.f32.mxu0 0.0
    %1055 = vmatmul.mubr.f32.gmra.mrb[0].mxu0 %v919
    %v1056 = vpop.f32.mrb[0].mxu0
    %v1057 = vadd.f32 0.0, %v1056
    %v1058 = vpop.f32.mrb[0].mxu0
    %1059 = vmatprep.mubr.f32.mxu0 0.0
    %1060 = vmatmul.mubr.f32.gmra.mrb[0].mxu0 %v922
    %v1061 = vpop.f32.mrb[0].mxu0
    %v1062 = vadd.f32 0.0, %v1061
    %v1063 = vpop.f32.mrb[0].mxu0
    %1064 = vmatprep.mubr.f32.mxu0 0.0
    %1065 = vmatmul.mubr.f32.gmra.mrb[0].mxu0 %v925
    %v1066 = vpop.f32.mrb[0].mxu0
    %v1067 = vadd.f32 0.0, %v1066
    %v1068 = vpop.f32.mrb[0].mxu0
    %1069 = vmatprep.mubr.f32.mxu0 0.0
    %1070 = vmatmul.mubr.f32.gmra.mrb[0].mxu0 %v928
    %v1071 = vpop.f32.mrb[0].mxu0
    %v1072 = vadd.f32 0.0, %v1071
    %v1073 = vpop.f32.mrb[0].mxu0
    %1074 = vdwg.mxu0
    %v1075 = vld [vmem:[%s4] sm:$0xff]
    %v1076 = vld [vmem:[%s4 + $0x8] sm:$0xff]
    %v1077 = vmul.f32 %v997, %v143
    %v1078 = vmul.f32 %v1002, %v144
    %v1079 = vmul.f32 %v1007, %v145
    %v1080 = vmul.f32 %v1012, %v146
    %v1081 = vmul.f32 %v1017, %v147
    %v1082 = vmul.f32 %v1022, %v148
    %v1083 = vmul.f32 %v1027, %v149
    %v1084 = vmul.f32 %v1032, %v150
    %v1085 = vmul.f32 %v1037, %v151
    %v1086 = vmul.f32 %v1042, %v152
    %v1087 = vmul.f32 %v1047, %v153
    %v1088 = vmul.f32 %v1052, %v154
    %v1089 = vmul.f32 %v1057, %v155
    %v1090 = vmul.f32 %v1062, %v156
    %v1091 = vmul.f32 %v1067, %v157
    %v1092 = vmul.f32 %v1072, %v158
    %1093 = vmatprep.subr.mxu0 0.0
    %1094 = vmatpush1.msra.mxu0 %v1077
    %1095 = vmatprep.subr.mxu0 0.0
    %1096 = vmatpush1.msra.mxu0 %v1078
    %1097 = vmatprep.subr.mxu0 0.0
    %1098 = vmatpush1.msra.mxu0 %v1079
    %1099 = vmatprep.subr.mxu0 0.0
    %1100 = vmatpush1.msra.mxu0 %v1080
    %1101 = vmatprep.subr.mxu0 0.0
    %1102 = vmatpush1.msra.mxu0 %v1081
    %1103 = vmatprep.subr.mxu0 0.0
    %1104 = vmatpush1.msra.mxu0 %v1082
    %1105 = vmatprep.subr.mxu0 0.0
    %1106 = vmatpush1.msra.mxu0 %v1083
    %1107 = vmatprep.subr.mxu0 0.0
    %1108 = vmatpush1.msra.mxu0 %v1084
    %1109 = vmatprep.subr.mxu0 0.0
    %1110 = vmatpush1.msra.mxu0 %v1085
    %1111 = vmatprep.subr.mxu0 0.0
    %1112 = vmatpush1.msra.mxu0 %v1086
    %1113 = vmatprep.subr.mxu0 0.0
    %1114 = vmatpush1.msra.mxu0 %v1087
    %1115 = vmatprep.subr.mxu0 0.0
    %1116 = vmatpush1.msra.mxu0 %v1088
    %1117 = vmatprep.subr.mxu0 0.0
    %1118 = vmatpush1.msra.mxu0 %v1089
    %1119 = vmatprep.subr.mxu0 0.0
    %1120 = vmatpush1.msra.mxu0 %v1090
    %1121 = vmatprep.subr.mxu0 0.0
    %1122 = vmatpush1.msra.mxu0 %v1091
    %1123 = vmatprep.subr.mxu0 0.0
    %1124 = vmatpush1.msra.mxu0 %v1092
    %1125 = vmatprep.subr.mxu0 0.0
    %1126 = vmatpush1.msra.mxu0 0.0
    %1127 = vmatprep.subr.mxu0 0.0
    %1128 = vmatpush1.msra.mxu0 0.0
    %1129 = vmatprep.subr.mxu0 0.0
    %1130 = vmatpush1.msra.mxu0 0.0
    %1131 = vmatprep.subr.mxu0 0.0
    %1132 = vmatpush1.msra.mxu0 0.0
    %1133 = vmatprep.subr.mxu0 0.0
    %1134 = vmatpush1.msra.mxu0 0.0
    %1135 = vmatprep.subr.mxu0 0.0
    %1136 = vmatpush1.msra.mxu0 0.0
    %1137 = vmatprep.subr.mxu0 0.0
    %1138 = vmatpush1.msra.mxu0 0.0
    %1139 = vmatprep.subr.mxu0 0.0
    %1140 = vmatpush1.msra.mxu0 0.0
    %1141 = vmatprep.subr.mxu0 0.0
    %1142 = vmatpush1.msra.mxu0 0.0
    %1143 = vmatprep.subr.mxu0 0.0
    %1144 = vmatpush1.msra.mxu0 0.0
    %1145 = vmatprep.subr.mxu0 0.0
    %1146 = vmatpush1.msra.mxu0 0.0
    %1147 = vmatprep.subr.mxu0 0.0
    %1148 = vmatpush1.msra.mxu0 0.0
    %1149 = vmatprep.subr.mxu0 0.0
    %1150 = vmatpush1.msra.mxu0 0.0
    %1151 = vmatprep.subr.mxu0 0.0
    %1152 = vmatpush1.msra.mxu0 0.0
    %1153 = vmatprep.subr.mxu0 0.0
    %1154 = vmatpush1.msra.mxu0 0.0
    %1155 = vmatprep.subr.mxu0 0.0
    %1156 = vmatpush1.msra.mxu0 0.0
    %1157 = vmatprep.mubr.f32.mxu0 0.0
    %1158 = vmatmul.mubr.f32.gmra.mrb[0].mxu0 %v1075
    %v1159 = vpop.f32.mrb[0].mxu0
    %v1160 = vadd.f32 0.0, %v1159
    %v1161 = vpop.f32.mrb[0].mxu0
    %1162 = vmatprep.mubr.f32.mxu0 0.0
    %1163 = vmatmul.mubr.f32.gmra.mrb[0].mxu0 %v1076
    %v1164 = vpop.f32.mrb[0].mxu0
    %v1165 = vadd.f32 0.0, %v1164
    %v1166 = vpop.f32.mrb[0].mxu0
    %1167 = vdwg.mxu0
    %1172 = vrot.lane.b32.xlu0 %v51, 32
    %v1173 = vpop.permute.xlu0 %1172
    %1174 = vrot.lane.b32.xlu0 %v52, 32
    %v1175 = vpop.permute.xlu0 %1174
    %1176 = vrot.lane.b32.xlu0 %v53, 32
    %v1177 = vpop.permute.xlu0 %1176
    %1178 = vrot.lane.b32.xlu0 %v54, 32
    %v1179 = vpop.permute.xlu0 %1178
    %1184 = vrot.lane.b32.xlu0 %v60, 32
    %v1185 = vpop.permute.xlu0 %1184
    %v1188 = vsel %vm23, %v1160, 0
    %v1191 = vsel %vm23, %v1165, 0
    %1193 = vmatprep.subr.mxu0 0.0
    %1194 = vmatpush1.msra.mxu0 %v1173
    %1195 = vmatprep.subr.mxu0 0.0
    %1196 = vmatpush1.msra.mxu0 %v1175
    %1197 = vmatprep.subr.mxu0 0.0
    %1198 = vmatpush1.msra.mxu0 %v1177
    %1199 = vmatprep.subr.mxu0 0.0
    %1200 = vmatpush1.msra.mxu0 %v1179
    %1201 = vmatprep.subr.mxu0 0.0
    %1202 = vmatpush1.msra.mxu0 0.0
    %1203 = vmatprep.subr.mxu0 0.0
    %1204 = vmatpush1.msra.mxu0 0.0
    %1205 = vmatprep.subr.mxu0 0.0
    %1206 = vmatpush1.msra.mxu0 0.0
    %1207 = vmatprep.subr.mxu0 0.0
    %1208 = vmatpush1.msra.mxu0 0.0
    %1209 = vmatprep.subr.mxu0 0.0
    %1210 = vmatpush1.msra.mxu0 0.0
    %1211 = vmatprep.subr.mxu0 0.0
    %1212 = vmatpush1.msra.mxu0 0.0
    %1213 = vmatprep.subr.mxu0 0.0
    %1214 = vmatpush1.msra.mxu0 0.0
    %1215 = vmatprep.subr.mxu0 0.0
    %1216 = vmatpush1.msra.mxu0 0.0
    %1217 = vmatprep.subr.mxu0 0.0
    %1218 = vmatpush1.msra.mxu0 0.0
    %1219 = vmatprep.subr.mxu0 0.0
    %1220 = vmatpush1.msra.mxu0 0.0
    %1221 = vmatprep.subr.mxu0 0.0
    %1222 = vmatpush1.msra.mxu0 0.0
    %1223 = vmatprep.subr.mxu0 0.0
    %1224 = vmatpush1.msra.mxu0 0.0
    %1225 = vmatprep.subr.mxu0 0.0
    %1226 = vmatpush1.msra.mxu0 0.0
    %1227 = vmatprep.subr.mxu0 0.0
    %1228 = vmatpush1.msra.mxu0 0.0
    %1229 = vmatprep.subr.mxu0 0.0
    %1230 = vmatpush1.msra.mxu0 0.0
    %1231 = vmatprep.subr.mxu0 0.0
    %1232 = vmatpush1.msra.mxu0 0.0
    %1233 = vmatprep.subr.mxu0 0.0
    %1234 = vmatpush1.msra.mxu0 0.0
    %1235 = vmatprep.subr.mxu0 0.0
    %1236 = vmatpush1.msra.mxu0 0.0
    %1237 = vmatprep.subr.mxu0 0.0
    %1238 = vmatpush1.msra.mxu0 0.0
    %1239 = vmatprep.subr.mxu0 0.0
    %1240 = vmatpush1.msra.mxu0 0.0
    %1241 = vmatprep.subr.mxu0 0.0
    %1242 = vmatpush1.msra.mxu0 0.0
    %1243 = vmatprep.subr.mxu0 0.0
    %1244 = vmatpush1.msra.mxu0 0.0
    %1245 = vmatprep.subr.mxu0 0.0
    %1246 = vmatpush1.msra.mxu0 0.0
    %1247 = vmatprep.subr.mxu0 0.0
    %1248 = vmatpush1.msra.mxu0 0.0
    %1249 = vmatprep.subr.mxu0 0.0
    %1250 = vmatpush1.msra.mxu0 0.0
    %1251 = vmatprep.subr.mxu0 0.0
    %1252 = vmatpush1.msra.mxu0 0.0
    %1253 = vmatprep.subr.mxu0 0.0
    %1254 = vmatpush1.msra.mxu0 0.0
    %1255 = vmatprep.subr.mxu0 0.0
    %1256 = vmatpush1.msra.mxu0 0.0
    %1257 = vmatprep.mubr.f32.mxu0 0.0
    %1258 = vmatmul.mubr.f32.gmra.mrb[0].mxu0 %v1188
    %v1259 = vpop.f32.mrb[0].mxu0
    %v1260 = vadd.f32 %v1185, %v1259
    %v1261 = vpop.f32.mrb[0].mxu0
    %1262 = vmatprep.mubr.f32.mxu0 0.0
    %1263 = vmatmul.mubr.f32.gmra.mrb[0].mxu0 %v1191
    %v1264 = vpop.f32.mrb[0].mxu0
    %v1265 = vadd.f32 %v1185, %v1264
    %v1266 = vpop.f32.mrb[0].mxu0
    %1267 = vdwg.mxu0
    %v1268 = vadd.f32 %v1260, %v21
    %v1269 = vadd.f32 %v1265, %v22
    %1270 = vst.msk [vmem:[#allocation2] sm:$0xff] %vm23, %v1268
    %1271 = vst.msk [vmem:[#allocation2 + $0x8] sm:$0xff] %vm23, %v1269
    // Predicated region
    $region22: #{transformer1_forward.1} parent=1 // pred_check
      _
    $region23: #{transformer1_forward.1} parent=1 // pred_check_branch
      %1273 = sbr.rel (0) target = $region25
    $region24: #{transformer1_forward.1} parent=1 // pred_region
      %s1275 = ssub.s32 256, 256
      %1276 = vsyncadd [#allocation3], %s1275
      %s1277 = sshll.u32 [#allocation2], 4
      %s1278 = int_to_ptr.vmem [resolvable:$true] %s1277
      %1283 = dma.vmem_to_hbm [thread:$0]  %s1278, 256, %s5, [#allocation3], 128, 128, 8
    $region25: #{transformer1_forward.1} parent=1 // pred_fallthru
      _
    // Predicated region
    $region26: #{transformer1_forward.1} parent=1 // pred_check
      _
    $region27: #{transformer1_forward.1} parent=1 // pred_check_branch
      %1285 = sbr.rel (0) target = $region29
    $region28: #{transformer1_forward.1} parent=1 // pred_region
      %1286 = dma.done [#allocation3], 256
    $region29: #{transformer1_forward.1} parent=1 // pred_fallthru
      _
    %1287 = vsyncpa [#allocation3], 1

</llo_original>
